<compile_context>
chip_gen: v7x
topology: tpu7x:2x2x1
jax: 0.10.0
libtpu: 0.0.40
codegen_flags: <defaults>
</compile_context>

<pallas_src>
import functools

import jax
import jax.numpy as jnp
from jax.experimental import pallas as pl
from jax.experimental.pallas import tpu as pltpu


def _round_up(n, m):
    return ((n + m - 1) // m) * m


def _mlp_kernel(x_ref, w1_ref, b1_ref, w2_ref, b2_ref, o_ref, *, activation):
    if activation == "gelu":
        act = jax.nn.gelu
    else:
        act = lambda v: jnp.maximum(v, 0.0)
    # fc1: MXU matmul with f32 accumulation; bias + activation in f32 (VPU/EUP).
    h = jnp.dot(x_ref[...], w1_ref[...], preferred_element_type=jnp.float32)
    # Cast back to the compute dtype immediately so the (tm, hid_p) intermediate
    # lives/spills at half width and feeds the second MXU matmul directly.
    h = act(h + b1_ref[...]).astype(w2_ref.dtype)
    # TODO(synk): nn.Dropout(p=0.4) in training mode would mask+scale h here
    # (pltpu.prng_seed + pltpu.stateful_bernoulli); eval mode is identity.
    y = jnp.dot(h, w2_ref[...], preferred_element_type=jnp.float32)
    y = act(y + b2_ref[...])
    o_ref[...] = y.astype(o_ref.dtype)


def prepare_mlp_params(w1, b1, w2, b2, *, compute_dtype=jnp.bfloat16, lane_align=256):
    """One-time weight preparation: cast to compute dtype + zero-pad feature dims.

    w1: [input_dim, hidden]   b1: [hidden]
    w2: [hidden, output_dim]  b2: [output_dim]
    Zero padding is mathematically inert (zero weight rows/cols; padded output
    columns are sliced off after the kernel).  Done once, NOT per forward call.
    """
    in_dim, hidden = w1.shape
    out_dim = w2.shape[1]
    cdt = jnp.dtype(compute_dtype)
    align = max(int(lane_align), 128)          # 256 feeds the v6e/v7x 256x256 MXU
    hid_p = _round_up(hidden, align)
    out_p = _round_up(out_dim, align)

    w1_p = jnp.zeros((in_dim, hid_p), cdt).at[:, :hidden].set(w1.astype(cdt))
    b1_p = jnp.zeros((1, hid_p), jnp.float32).at[0, :hidden].set(b1.astype(jnp.float32))
    w2_p = jnp.zeros((hid_p, out_p), cdt).at[:hidden, :out_dim].set(w2.astype(cdt))
    b2_p = jnp.zeros((1, out_p), jnp.float32).at[0, :out_dim].set(b2.astype(jnp.float32))

    return {
        "w1": w1_p, "b1": b1_p, "w2": w2_p, "b2": b2_p,
        "in_dim": in_dim, "hidden": hidden, "out_dim": out_dim,
        "hid_p": hid_p, "out_p": out_p, "compute_dtype": cdt,
    }


def mlp_forward(x, params, *, row_tile=None, activation="relu"):
    """x: [..., input_dim] -> [..., output_dim]; matches MLP.forward in eval mode."""
    if activation not in ("relu", "gelu"):
        raise ValueError(f"activation function {activation} is not supported")

    in_dim = params["in_dim"]
    assert x.shape[-1] == in_dim, (x.shape, in_dim)
    cdt = params["compute_dtype"]
    hid_p, out_p, out_dim = params["hid_p"], params["out_p"], params["out_dim"]
    lead = x.shape[:-1]
    out_dtype = x.dtype

    x2 = x.reshape(-1, in_dim)
    if x2.dtype != cdt:
        x2 = x2.astype(cdt)                 # single cast; no per-call padding copies
    M = x2.shape[0]

    # Row tile: multiple of the compute-dtype sublane packing (8 f32 / 16 bf16 /
    # 32 int8-fp8).  Larger tiles when feature dims are small so each grid step
    # does enough MXU work to hide DMA + per-step overhead.
    sub = max(8, 32 // cdt.itemsize)
    if row_tile is None:
        row_tile = 512 if max(in_dim, hid_p, out_p) <= 512 else 256
    tm = min(_round_up(int(row_tile), sub), _round_up(M, sub))
    grid_m = pl.cdiv(M, tm)                 # partial last block handles M % tm

    itm = cdt.itemsize
    out_itm = jnp.dtype(out_dtype).itemsize
    flops = 2 * M * (in_dim * hid_p + hid_p * out_p)
    transcendentals = M * (hid_p + out_p) if activation == "gelu" else 0
    bytes_accessed = (
        M * in_dim * itm
        + in_dim * hid_p * itm + hid_p * out_p * itm
        + (hid_p + out_p) * 4
        + M * out_p * out_itm
    )

    # VMEM footprint: single-buffered weights + double-buffered x/out row tiles
    # + f32 accumulators / compute-dtype intermediate.
    vmem_est = (
        in_dim * hid_p * itm + hid_p * out_p * itm
        + (hid_p + out_p) * 4
        + 2 * tm * in_dim * itm
        + 2 * tm * out_p * out_itm
        + tm * hid_p * (4 + itm)
        + tm * out_p * 4
    )
    vmem_limit = min(64 * 1024 * 1024, max(32 * 1024 * 1024, int(1.5 * vmem_est)))
    # TODO(synk): when (in_dim*hid_p + hid_p*out_p)*itemsize approaches the v7x
    # 64 MiB VMEM budget, add a hidden/K grid axis with an f32 VMEM accumulator
    # + pl.when init/finalize so weights stream instead of staying resident.
    # TODO(synk): optional fp8 weight path (per-channel scales in the f32
    # epilogue) for v7x inference.

    def call(buffered_weights):
        wmode = dict(pipeline_mode=pl.Buffered(1)) if buffered_weights else {}
        grid_spec = pltpu.PrefetchScalarGridSpec(
            num_scalar_prefetch=0,
            grid=(grid_m,),
            in_specs=[
                pl.BlockSpec((tm, in_dim), lambda i: (i, 0)),              # x rows
                pl.BlockSpec((in_dim, hid_p), lambda i: (0, 0), **wmode),  # W1 (resident)
                pl.BlockSpec((1, hid_p), lambda i: (0, 0), **wmode),       # b1
                pl.BlockSpec((hid_p, out_p), lambda i: (0, 0), **wmode),   # W2 (resident)
                pl.BlockSpec((1, out_p), lambda i: (0, 0), **wmode),       # b2
            ],
            out_specs=pl.BlockSpec((tm, out_p), lambda i: (i, 0)),
        )
        return pl.pallas_call(
            functools.partial(_mlp_kernel, activation=activation),
            out_shape=jax.ShapeDtypeStruct((M, out_p), out_dtype),
            grid_spec=grid_spec,
            compiler_params=pltpu.CompilerParams(
                dimension_semantics=("parallel",),
                vmem_limit_bytes=vmem_limit),
            cost_estimate=pl.CostEstimate(
                flops=flops, transcendentals=transcendentals,
                bytes_accessed=bytes_accessed),
        )(x2, params["w1"], params["b1"], params["w2"], params["b2"])

    try:
        # Single-buffer the resident weights (constant index map) to halve
        # their VMEM footprint.
        out2 = call(buffered_weights=True)
    except Exception:
        # Robust fallback: default (double-buffered) pipelining for weights.
        out2 = call(buffered_weights=False)

    if out_p != out_dim:
        out2 = out2[:, :out_dim]
    return out2.reshape(*lead, out_dim)


def init_mlp_params(key, input_dim, hidden_dim, output_dim, dtype=jnp.float32):
    """Deterministic init matching nn.Linear shapes (weights stored [in, out])."""
    k1, k2, k3, k4 = jax.random.split(key, 4)
    lim1 = 1.0 / (input_dim ** 0.5)
    lim2 = 1.0 / (hidden_dim ** 0.5)
    w1 = jax.random.uniform(k1, (input_dim, hidden_dim), dtype, -lim1, lim1)
    b1 = jax.random.uniform(k2, (hidden_dim,), dtype, -lim1, lim1)
    w2 = jax.random.uniform(k3, (hidden_dim, output_dim), dtype, -lim2, lim2)
    b2 = jax.random.uniform(k4, (output_dim,), dtype, -lim2, lim2)
    return w1, b1, w2, b2


if __name__ == "__main__":
    # Small shapes consistent with the module: tokens [batch, seq, input_dim].
    batch, seq = 2, 8
    input_dim, hidden_dim, output_dim = 32, 64, 32

    key = jax.random.PRNGKey(0)
    kx, kp = jax.random.split(key)
    x = jax.random.normal(kx, (batch, seq, input_dim), jnp.float32)
    w1, b1, w2, b2 = init_mlp_params(kp, input_dim, hidden_dim, output_dim)

    # Pure-JAX reference (dropout = identity in eval mode).
    ref = jnp.maximum(x @ w1 + b1, 0.0)
    ref = jnp.maximum(ref @ w2 + b2, 0.0)

    # Default path: bf16 MXU operands, f32 accumulation / bias / ReLU.
    params_bf16 = prepare_mlp_params(w1, b1, w2, b2)
    out_bf16 = jax.block_until_ready(mlp_forward(x, params_bf16))
    assert out_bf16.shape == (batch, seq, output_dim)
    assert jnp.allclose(out_bf16, ref, atol=1.5e-1, rtol=1.5e-1)

    # f32-operand path.  Tolerance allows for the MXU's default-precision f32
    # matmul passes on either side; structural/tiling bugs would be O(1) off.
    params_f32 = prepare_mlp_params(w1, b1, w2, b2, compute_dtype=jnp.float32)
    out_f32 = jax.block_until_ready(mlp_forward(x, params_f32))
    assert out_f32.shape == (batch, seq, output_dim)
    assert jnp.allclose(out_f32, ref, atol=2e-2, rtol=2e-2)

    print("KERNEL_OK")
</pallas_src>

<mosaic_0001>
module attributes {stable_mosaic.version = 11 : i64} {
  func.func @_mlp_kernel(%arg0: i32, %arg1: memref<16x32xbf16, #tpu.memory_space<vmem>>, %arg2: memref<32x256xbf16, #tpu.memory_space<vmem>>, %arg3: memref<1x256xf32, #tpu.memory_space<vmem>>, %arg4: memref<256x256xbf16, #tpu.memory_space<vmem>>, %arg5: memref<1x256xf32, #tpu.memory_space<vmem>>, %arg6: memref<16x256xf32, #tpu.memory_space<vmem>>) attributes {dimension_semantics = [#tpu.dimension_semantics<parallel>], iteration_bounds = array<i64: 1>, scalar_prefetch = 0 : i64, scratch_operands = 0 : i64, tpu.core_type = #tpu.core_type<tc>, window_params = [{transform_indices = @transform_0, window_bounds = array<i64: 16, 32>}, {pipeline_mode = #tpu.pipeline_mode<synchronous>, transform_indices = @transform_1, window_bounds = array<i64: 32, 256>}, {pipeline_mode = #tpu.pipeline_mode<synchronous>, transform_indices = @transform_2, window_bounds = array<i64: 1, 256>}, {pipeline_mode = #tpu.pipeline_mode<synchronous>, transform_indices = @transform_3, window_bounds = array<i64: 256, 256>}, {pipeline_mode = #tpu.pipeline_mode<synchronous>, transform_indices = @transform_4, window_bounds = array<i64: 1, 256>}, {transform_indices = @transform_5, window_bounds = array<i64: 16, 256>}]} {
    %c0 = arith.constant 0 : index
    %c0_0 = arith.constant 0 : index
    %0 = vector.load %arg1[%c0, %c0_0] : memref<16x32xbf16, #tpu.memory_space<vmem>>, vector<16x32xbf16>
    %c0_1 = arith.constant 0 : index
    %c0_2 = arith.constant 0 : index
    %1 = vector.load %arg2[%c0_1, %c0_2] : memref<32x256xbf16, #tpu.memory_space<vmem>>, vector<32x256xbf16>
    %cst = arith.constant dense<0.000000e+00> : vector<16x256xf32>
    %2 = tpu.matmul %0, %1, %cst {dimension_numbers = #tpu.dot_dimension_numbers<[1], [0], [0], [1], [0, 0, 1, 1], [], []>} : vector<16x32xbf16>, vector<32x256xbf16>, vector<16x256xf32> -> vector<16x256xf32>
    %c0_3 = arith.constant 0 : index
    %c0_4 = arith.constant 0 : index
    %3 = vector.load %arg3[%c0_3, %c0_4] : memref<1x256xf32, #tpu.memory_space<vmem>>, vector<1x256xf32>
    %4 = vector.broadcast %3 : vector<1x256xf32> to vector<16x256xf32>
    %5 = arith.addf %2, %4 : vector<16x256xf32>
    %cst_5 = arith.constant 0.000000e+00 : f32
    %6 = vector.broadcast %cst_5 : f32 to vector<16x256xf32>
    %7 = arith.maximumf %5, %6 : vector<16x256xf32>
    %8 = arith.truncf %7 : vector<16x256xf32> to vector<16x256xbf16>
    %c0_6 = arith.constant 0 : index
    %c0_7 = arith.constant 0 : index
    %9 = vector.load %arg4[%c0_6, %c0_7] : memref<256x256xbf16, #tpu.memory_space<vmem>>, vector<256x256xbf16>
    %cst_8 = arith.constant dense<0.000000e+00> : vector<16x256xf32>
    %10 = tpu.matmul %8, %9, %cst_8 {dimension_numbers = #tpu.dot_dimension_numbers<[1], [0], [0], [1], [0, 0, 1, 1], [], []>} : vector<16x256xbf16>, vector<256x256xbf16>, vector<16x256xf32> -> vector<16x256xf32>
    %c0_9 = arith.constant 0 : index
    %c0_10 = arith.constant 0 : index
    %11 = vector.load %arg5[%c0_9, %c0_10] : memref<1x256xf32, #tpu.memory_space<vmem>>, vector<1x256xf32>
    %12 = vector.broadcast %11 : vector<1x256xf32> to vector<16x256xf32>
    %13 = arith.addf %10, %12 : vector<16x256xf32>
    %cst_11 = arith.constant 0.000000e+00 : f32
    %14 = vector.broadcast %cst_11 : f32 to vector<16x256xf32>
    %15 = arith.maximumf %13, %14 : vector<16x256xf32>
    %c0_12 = arith.constant 0 : index
    %c0_13 = arith.constant 0 : index
    %16 = vector.load %arg6[%c0_12, %c0_13] : memref<16x256xf32, #tpu.memory_space<vmem>>, vector<16x256xf32>
    tpu.vector_store %arg6[%c0_12, %c0_13], %15 {strides = array<i32>} : memref<16x256xf32, #tpu.memory_space<vmem>>, vector<16x256xf32>,
    return
  }
  func.func @transform_0(%arg0: i32) -> (i32, i32) {
    %c0_i32 = arith.constant 0 : i32
    %c0_i32_0 = arith.constant 0 : i32
    return %arg0, %c0_i32 : i32, i32
  }
  func.func @transform_1(%arg0: i32) -> (i32, i32) {
    %c0_i32 = arith.constant 0 : i32
    %c0_i32_0 = arith.constant 0 : i32
    %c0_i32_1 = arith.constant 0 : i32
    return %c0_i32, %c0_i32_0 : i32, i32
  }
  func.func @transform_2(%arg0: i32) -> (i32, i32) {
    %c0_i32 = arith.constant 0 : i32
    %c0_i32_0 = arith.constant 0 : i32
    %c0_i32_1 = arith.constant 0 : i32
    return %c0_i32, %c0_i32_0 : i32, i32
  }
  func.func @transform_3(%arg0: i32) -> (i32, i32) {
    %c0_i32 = arith.constant 0 : i32
    %c0_i32_0 = arith.constant 0 : i32
    %c0_i32_1 = arith.constant 0 : i32
    return %c0_i32, %c0_i32_0 : i32, i32
  }
  func.func @transform_4(%arg0: i32) -> (i32, i32) {
    %c0_i32 = arith.constant 0 : i32
    %c0_i32_0 = arith.constant 0 : i32
    %c0_i32_1 = arith.constant 0 : i32
    return %c0_i32, %c0_i32_0 : i32, i32
  }
  func.func @transform_5(%arg0: i32) -> (i32, i32) {
    %c0_i32 = arith.constant 0 : i32
    %c0_i32_0 = arith.constant 0 : i32
    return %arg0, %c0_i32 : i32, i32
  }
}

module attributes {stable_mosaic.version = 11 : i64} {
  func.func @_mlp_kernel(%arg0: i32, %arg1: memref<16x32xbf16, #tpu.memory_space<vmem>>, %arg2: memref<32x256xbf16, #tpu.memory_space<vmem>>, %arg3: memref<1x256xf32, #tpu.memory_space<vmem>>, %arg4: memref<256x256xbf16, #tpu.memory_space<vmem>>, %arg5: memref<1x256xf32, #tpu.memory_space<vmem>>, %arg6: memref<16x256xf32, #tpu.memory_space<vmem>>) attributes {dimension_semantics = [#tpu.dimension_semantics<parallel>], iteration_bounds = array<i64: 1>, scalar_prefetch = 0 : i64, scratch_operands = 0 : i64, tpu.core_type = #tpu.core_type<tc>, window_params = [{transform_indices = @transform_0, window_bounds = array<i64: 16, 32>}, {pipeline_mode = #tpu.pipeline_mode<synchronous>, transform_indices = @transform_1, window_bounds = array<i64: 32, 256>}, {pipeline_mode = #tpu.pipeline_mode<synchronous>, transform_indices = @transform_2, window_bounds = array<i64: 1, 256>}, {pipeline_mode = #tpu.pipeline_mode<synchronous>, transform_indices = @transform_3, window_bounds = array<i64: 256, 256>}, {pipeline_mode = #tpu.pipeline_mode<synchronous>, transform_indices = @transform_4, window_bounds = array<i64: 1, 256>}, {transform_indices = @transform_5, window_bounds = array<i64: 16, 256>}]} {
    %c0 = arith.constant 0 : index
    %c0_0 = arith.constant 0 : index
    %0 = vector.load %arg1[%c0, %c0_0] : memref<16x32xbf16, #tpu.memory_space<vmem>>, vector<16x32xbf16>
    %c0_1 = arith.constant 0 : index
    %c0_2 = arith.constant 0 : index
    %1 = vector.load %arg2[%c0_1, %c0_2] : memref<32x256xbf16, #tpu.memory_space<vmem>>, vector<32x256xbf16>
    %cst = arith.constant dense<0.000000e+00> : vector<16x256xf32>
    %2 = tpu.matmul %0, %1, %cst {dimension_numbers = #tpu.dot_dimension_numbers<[1], [0], [0], [1], [0, 0, 1, 1], [], []>} : vector<16x32xbf16>, vector<32x256xbf16>, vector<16x256xf32> -> vector<16x256xf32>
    %c0_3 = arith.constant 0 : index
    %c0_4 = arith.constant 0 : index
    %3 = vector.load %arg3[%c0_3, %c0_4] : memref<1x256xf32, #tpu.memory_space<vmem>>, vector<1x256xf32>
    %4 = vector.broadcast %3 : vector<1x256xf32> to vector<16x256xf32>
    %5 = arith.addf %2, %4 : vector<16x256xf32>
    %cst_5 = arith.constant 0.000000e+00 : f32
    %6 = vector.broadcast %cst_5 : f32 to vector<16x256xf32>
    %7 = arith.maximumf %5, %6 : vector<16x256xf32>
    %8 = arith.truncf %7 : vector<16x256xf32> to vector<16x256xbf16>
    %c0_6 = arith.constant 0 : index
    %c0_7 = arith.constant 0 : index
    %9 = vector.load %arg4[%c0_6, %c0_7] : memref<256x256xbf16, #tpu.memory_space<vmem>>, vector<256x256xbf16>
    %cst_8 = arith.constant dense<0.000000e+00> : vector<16x256xf32>
    %10 = tpu.matmul %8, %9, %cst_8 {dimension_numbers = #tpu.dot_dimension_numbers<[1], [0], [0], [1], [0, 0, 1, 1], [], []>} : vector<16x256xbf16>, vector<256x256xbf16>, vector<16x256xf32> -> vector<16x256xf32>
    %c0_9 = arith.constant 0 : index
    %c0_10 = arith.constant 0 : index
    %11 = vector.load %arg5[%c0_9, %c0_10] : memref<1x256xf32, #tpu.memory_space<vmem>>, vector<1x256xf32>
    %12 = vector.broadcast %11 : vector<1x256xf32> to vector<16x256xf32>
    %13 = arith.addf %10, %12 : vector<16x256xf32>
    %cst_11 = arith.constant 0.000000e+00 : f32
    %14 = vector.broadcast %cst_11 : f32 to vector<16x256xf32>
    %15 = arith.maximumf %13, %14 : vector<16x256xf32>
    %c0_12 = arith.constant 0 : index
    %c0_13 = arith.constant 0 : index
    %16 = vector.load %arg6[%c0_12, %c0_13] : memref<16x256xf32, #tpu.memory_space<vmem>>, vector<16x256xf32>
    tpu.vector_store %arg6[%c0_12, %c0_13], %15 {strides = array<i32>} : memref<16x256xf32, #tpu.memory_space<vmem>>, vector<16x256xf32>,
    return
  }
  func.func @transform_0(%arg0: i32) -> (i32, i32) {
    %c0_i32 = arith.constant 0 : i32
    %c0_i32_0 = arith.constant 0 : i32
    return %arg0, %c0_i32 : i32, i32
  }
  func.func @transform_1(%arg0: i32) -> (i32, i32) {
    %c0_i32 = arith.constant 0 : i32
    %c0_i32_0 = arith.constant 0 : i32
    %c0_i32_1 = arith.constant 0 : i32
    return %c0_i32, %c0_i32_0 : i32, i32
  }
  func.func @transform_2(%arg0: i32) -> (i32, i32) {
    %c0_i32 = arith.constant 0 : i32
    %c0_i32_0 = arith.constant 0 : i32
    %c0_i32_1 = arith.constant 0 : i32
    return %c0_i32, %c0_i32_0 : i32, i32
  }
  func.func @transform_3(%arg0: i32) -> (i32, i32) {
    %c0_i32 = arith.constant 0 : i32
    %c0_i32_0 = arith.constant 0 : i32
    %c0_i32_1 = arith.constant 0 : i32
    return %c0_i32, %c0_i32_0 : i32, i32
  }
  func.func @transform_4(%arg0: i32) -> (i32, i32) {
    %c0_i32 = arith.constant 0 : i32
    %c0_i32_0 = arith.constant 0 : i32
    %c0_i32_1 = arith.constant 0 : i32
    return %c0_i32, %c0_i32_0 : i32, i32
  }
  func.func @transform_5(%arg0: i32) -> (i32, i32) {
    %c0_i32 = arith.constant 0 : i32
    %c0_i32_0 = arith.constant 0 : i32
    return %arg0, %c0_i32 : i32, i32
  }
}

</mosaic_0001>

<llo_original>
// kernel: tpu_custom_call.1
$region0: #{tpu_custom_call.1}
  #allocation0 [shape = 'u32[]', space=smem, size = 0x4, offset = 0x4, fixed_abs, tag = 'smem constant byte address 0x4 - core index']
  #allocation1 [shape = 'u32[144,128]{1,0:T(1,128)}', space=vmem, size = 0x12000, scoped, tag = 'internal scratch']
  %s0 = inlined_call_operand.hbm [shape: bf16[16,32], index: 0, kind: input, shape index: {}]
  %s1 = inlined_call_operand.hbm [shape: bf16[32,256], index: 1, kind: input, shape index: {}]
  %s2 = inlined_call_operand.vmem [shape: f32[1,256], index: 2, kind: input, shape index: {}]
  %s3 = inlined_call_operand.hbm [shape: bf16[256,256], index: 3, kind: input, shape index: {}]
  %s4 = inlined_call_operand.vmem [shape: f32[1,256], index: 4, kind: input, shape index: {}]
  %s5 = inlined_call_operand.hbm [shape: f32[16,256], index: 5, kind: output, shape index: {}]
  %s6 = sld [smem:[#allocation0]]
  $region42: #{tpu_custom_call.1} parent=0
    _
  %s8 = ssub.s32 1, %s6
  %s9 = scalar_select 0, %s8, %s6
  $region1: #{tpu_custom_call.1} parent=0
    #allocation2 [shape = 'u8[4096]{0}', space=vmem, size = 0x1000, scoped, tag = 'input window, operand 0, single buffered']
    #allocation3 [shape = 's32[1]{0}', space=sflag, size = 0x4, scoped, tag = 'scoped memory for tpu_custom_call.1']
    #allocation4 [shape = 's32[1]{0}', space=sflag, size = 0x4, scoped, tag = 'scoped memory for tpu_custom_call.1']
    #allocation5 [shape = 'u8[16384]{0}', space=vmem, size = 0x4000, scoped, tag = 'input window, operand 1, single buffered']
    #allocation6 [shape = 's32[1]{0}', space=sflag, size = 0x4, scoped, tag = 'scoped memory for tpu_custom_call.1']
    #allocation7 [shape = 'u8[131072]{0}', space=vmem, size = 0x20000, scoped, tag = 'input window, operand 3, single buffered']
    #allocation8 [shape = 'u8[16384]{0}', space=vmem, size = 0x4000, scoped, tag = 'output window, operand 0, single buffered']
    %10 = vsyncpa [#allocation3], 0
    %11 = vsyncpa [#allocation6], 0
    %12 = vsyncpa [#allocation4], 0
    // Predicated region
    $region2: #{tpu_custom_call.1} parent=1 // pred_check
      _
    $region3: #{tpu_custom_call.1} parent=1 // pred_check_branch
      %14 = sbr.rel (0) target = $region5
    $region4: #{tpu_custom_call.1} parent=1 // pred_region
      %s16 = ssub.s32 128, 128
      %17 = vsyncadd [#allocation3], %s16
      %s18 = sshll.u32 [#allocation2], 4
      %s19 = int_to_ptr.vmem [resolvable:$true] %s18
      %24 = dma.hbm_to_vmem [thread:$0]  %s0, 128, %s19, [#allocation3], 64, 64, 4
    $region5: #{tpu_custom_call.1} parent=1 // pred_fallthru
      _
    // Predicated region
    $region6: #{tpu_custom_call.1} parent=1 // pred_check
      _
    $region7: #{tpu_custom_call.1} parent=1 // pred_check_branch
      %26 = sbr.rel (0) target = $region9
    $region8: #{tpu_custom_call.1} parent=1 // pred_region
      %s28 = ssub.s32 512, 512
      %29 = vsyncadd [#allocation6], %s28
      %s30 = sshll.u32 [#allocation5], 4
      %s31 = int_to_ptr.vmem [resolvable:$true] %s30
      %36 = dma.hbm_to_vmem [thread:$0]  %s1, 512, %s31, [#allocation6], 128, 128, 8
    $region9: #{tpu_custom_call.1} parent=1 // pred_fallthru
      _
    // Predicated region
    $region10: #{tpu_custom_call.1} parent=1 // pred_check
      _
    $region11: #{tpu_custom_call.1} parent=1 // pred_check_branch
      %38 = sbr.rel (0) target = $region13
    $region12: #{tpu_custom_call.1} parent=1 // pred_region
      _
    $region13: #{tpu_custom_call.1} parent=1 // pred_fallthru
      _
    // Predicated region
    $region14: #{tpu_custom_call.1} parent=1 // pred_check
      _
    $region15: #{tpu_custom_call.1} parent=1 // pred_check_branch
      %40 = sbr.rel (0) target = $region17
    $region16: #{tpu_custom_call.1} parent=1 // pred_region
      %s42 = ssub.s32 4096, 4096
      %43 = vsyncadd [#allocation6], %s42
      %s44 = sshll.u32 [#allocation7], 4
      %s45 = int_to_ptr.vmem [resolvable:$true] %s44
      %50 = dma.hbm_to_vmem [thread:$0]  %s3, 4096, %s45, [#allocation6], 128, 128, 8
    $region17: #{tpu_custom_call.1} parent=1 // pred_fallthru
      _
    // Predicated region
    $region18: #{tpu_custom_call.1} parent=1 // pred_check
      _
    $region19: #{tpu_custom_call.1} parent=1 // pred_check_branch
      %52 = sbr.rel (0) target = $region21
    $region20: #{tpu_custom_call.1} parent=1 // pred_region
      _
    $region21: #{tpu_custom_call.1} parent=1 // pred_fallthru
      _
    // Predicated region
    $region22: #{tpu_custom_call.1} parent=1 // pred_check
      _
    $region23: #{tpu_custom_call.1} parent=1 // pred_check_branch
      %54 = sbr.rel (0) target = $region25
    $region24: #{tpu_custom_call.1} parent=1 // pred_region
      %55 = dma.done [#allocation3], 128
    $region25: #{tpu_custom_call.1} parent=1 // pred_fallthru
      _
    // Predicated region
    $region26: #{tpu_custom_call.1} parent=1 // pred_check
      _
    $region27: #{tpu_custom_call.1} parent=1 // pred_check_branch
      %57 = sbr.rel (0) target = $region29
    $region28: #{tpu_custom_call.1} parent=1 // pred_region
      %58 = dma.done [#allocation6], 512
    $region29: #{tpu_custom_call.1} parent=1 // pred_fallthru
      _
    // Predicated region
    $region30: #{tpu_custom_call.1} parent=1 // pred_check
      _
    $region31: #{tpu_custom_call.1} parent=1 // pred_check_branch
      %60 = sbr.rel (0) target = $region33
    $region32: #{tpu_custom_call.1} parent=1 // pred_region
      %61 = dma.done [#allocation6], 4096
    $region33: #{tpu_custom_call.1} parent=1 // pred_fallthru
      _
    %v63 = vld [vmem:[#allocation2] sm:$0xf]
    %v64 = vld [vmem:[#allocation2 + $0x4] sm:$0xf]
    %v65 = vld [vmem:[#allocation5] sm:$0xff]
    %v66 = vld [vmem:[#allocation5 + $0x8] sm:$0xff]
    %v67 = vld [vmem:[#allocation5 + $0x10] sm:$0xff]
    %v68 = vld [vmem:[#allocation5 + $0x18] sm:$0xff]
    %v69 = vld [vmem:[%s2] sm:$0x3]
    %v71 = vlaneseq
    %v72 = vshrl.u32 %v71, 7
    %v73 = vsub.s32 0, %v72
    %v74 = vrot.slane %v69, %v73
    %v75 = vlaneseq
    %v76 = vshrl.u32 %v75, 7
    %v77 = vsub.s32 1, %v76
    %v78 = vrot.slane %v69, %v77
    %v83 = vunpack.c.l.b16 %v63
    %v84 = vunpack.c.l.b16 %v64
    %v85 = vpack.c.b16 %v84, %v83
    %v90 = vunpack.c.l.b16 %v65
    %v91 = vunpack.c.h.b16 %v65
    %v92 = vunpack.c.l.b16 %v66
    %v93 = vunpack.c.h.b16 %v66
    %v94 = vunpack.c.l.b16 %v67
    %v95 = vunpack.c.h.b16 %v67
    %v96 = vunpack.c.l.b16 %v68
    %v97 = vunpack.c.h.b16 %v68
    %v98 = vpack.c.b16 %v92, %v90
    %v99 = vpack.c.b16 %v93, %v91
    %v100 = vpack.c.b16 %v96, %v94
    %v101 = vpack.c.b16 %v97, %v95
    %vm106 = vcmask 261120
    %v108 = vsel %vm106, %v85, 0
    %110 = vmatprep.subr.bf16.mxu0 %v99
    %111 = vmatpush1.bf16.msra.mxu0 %v98
    %112 = vmatprep.subr.bf16.mxu0 %v101
    %113 = vmatpush1.bf16.msra.mxu0 %v100
    %114 = vmatprep.subr.bf16.mxu0 0
    %115 = vmatpush1.bf16.msra.mxu0 0
    %116 = vmatprep.subr.bf16.mxu0 0
    %117 = vmatpush1.bf16.msra.mxu0 0
    %118 = vmatprep.subr.bf16.mxu0 0
    %119 = vmatpush1.bf16.msra.mxu0 0
    %120 = vmatprep.subr.bf16.mxu0 0
    %121 = vmatpush1.bf16.msra.mxu0 0
    %122 = vmatprep.subr.bf16.mxu0 0
    %123 = vmatpush1.bf16.msra.mxu0 0
    %124 = vmatprep.subr.bf16.mxu0 0
    %125 = vmatpush1.bf16.msra.mxu0 0
    %126 = vmatprep.subr.bf16.mxu0 0
    %127 = vmatpush1.bf16.msra.mxu0 0
    %128 = vmatprep.subr.bf16.mxu0 0
    %129 = vmatpush1.bf16.msra.mxu0 0
    %130 = vmatprep.subr.bf16.mxu0 0
    %131 = vmatpush1.bf16.msra.mxu0 0
    %132 = vmatprep.subr.bf16.mxu0 0
    %133 = vmatpush1.bf16.msra.mxu0 0
    %134 = vmatprep.subr.bf16.mxu0 0
    %135 = vmatpush1.bf16.msra.mxu0 0
    %136 = vmatprep.subr.bf16.mxu0 0
    %137 = vmatpush1.bf16.msra.mxu0 0
    %138 = vmatprep.subr.bf16.mxu0 0
    %139 = vmatpush1.bf16.msra.mxu0 0
    %140 = vmatprep.subr.bf16.mxu0 0
    %141 = vmatpush1.bf16.msra.mxu0 0
    %142 = vmatprep.mubr.bf16.mxu0 0
    %143 = vmatmul.mubr.bf16.gmra.mrb[0].mxu0 %v108
    %v144 = vpop.f32.mrb[0].mxu0
    %v145 = vadd.f32 %v74, %v144
    %v146 = vpop.f32.mrb[0].mxu0
    %v147 = vadd.f32 %v78, %v146
    %v148 = vpop.f32.mrb[0].mxu0
    %v149 = vadd.f32 %v74, %v148
    %v150 = vpop.f32.mrb[0].mxu0
    %v151 = vadd.f32 %v78, %v150
    %152 = vdwg.mxu0
    %v153 = vmax.f32 %v145, 0.0
    %v154 = vmax.f32 %v147, 0.0
    %v155 = vmax.f32 %v149, 0.0
    %v156 = vmax.f32 %v151, 0.0
    %v157 = vpack.c.bf16 %v155, %v153
    %v158 = vpack.c.bf16 %v156, %v154
    %v159 = vld [vmem:[#allocation7] sm:$0xff]
    %v160 = vld [vmem:[#allocation7 + $0x8] sm:$0xff]
    %v161 = vld [vmem:[#allocation7 + $0x10] sm:$0xff]
    %v162 = vld [vmem:[#allocation7 + $0x18] sm:$0xff]
    %v163 = vld [vmem:[#allocation7 + $0x20] sm:$0xff]
    %v164 = vld [vmem:[#allocation7 + $0x28] sm:$0xff]
    %v165 = vld [vmem:[#allocation7 + $0x30] sm:$0xff]
    %v166 = vld [vmem:[#allocation7 + $0x38] sm:$0xff]
    %v167 = vld [vmem:[#allocation7 + $0x40] sm:$0xff]
    %v168 = vld [vmem:[#allocation7 + $0x48] sm:$0xff]
    %v169 = vld [vmem:[#allocation7 + $0x50] sm:$0xff]
    %v170 = vld [vmem:[#allocation7 + $0x58] sm:$0xff]
    %v171 = vld [vmem:[#allocation7 + $0x60] sm:$0xff]
    %v172 = vld [vmem:[#allocation7 + $0x68] sm:$0xff]
    %v173 = vld [vmem:[#allocation7 + $0x70] sm:$0xff]
    %v174 = vld [vmem:[#allocation7 + $0x78] sm:$0xff]
    %v175 = vld [vmem:[#allocation7 + $0x80] sm:$0xff]
    %v176 = vld [vmem:[#allocation7 + $0x88] sm:$0xff]
    %v177 = vld [vmem:[#allocation7 + $0x90] sm:$0xff]
    %v178 = vld [vmem:[#allocation7 + $0x98] sm:$0xff]
    %v179 = vld [vmem:[#allocation7 + $0xa0] sm:$0xff]
    %v180 = vld [vmem:[#allocation7 + $0xa8] sm:$0xff]
    %v181 = vld [vmem:[#allocation7 + $0xb0] sm:$0xff]
    %v182 = vld [vmem:[#allocation7 + $0xb8] sm:$0xff]
    %v183 = vld [vmem:[#allocation7 + $0xc0] sm:$0xff]
    %v184 = vld [vmem:[#allocation7 + $0xc8] sm:$0xff]
    %v185 = vld [vmem:[#allocation7 + $0xd0] sm:$0xff]
    %v186 = vld [vmem:[#allocation7 + $0xd8] sm:$0xff]
    %v187 = vld [vmem:[#allocation7 + $0xe0] sm:$0xff]
    %v188 = vld [vmem:[#allocation7 + $0xe8] sm:$0xff]
    %v189 = vld [vmem:[#allocation7 + $0xf0] sm:$0xff]
    %v190 = vld [vmem:[#allocation7 + $0xf8] sm:$0xff]
    %v191 = vld [vmem:[%s4] sm:$0x3]
    %v193 = vlaneseq
    %v194 = vshrl.u32 %v193, 7
    %v195 = vsub.s32 0, %v194
    %v196 = vrot.slane %v191, %v195
    %v197 = vlaneseq
    %v198 = vshrl.u32 %v197, 7
    %v199 = vsub.s32 1, %v198
    %v200 = vrot.slane %v191, %v199
    %v235 = vunpack.c.l.b16 %v159
    %v236 = vunpack.c.h.b16 %v159
    %v237 = vunpack.c.l.b16 %v160
    %v238 = vunpack.c.h.b16 %v160
    %v239 = vunpack.c.l.b16 %v161
    %v240 = vunpack.c.h.b16 %v161
    %v241 = vunpack.c.l.b16 %v162
    %v242 = vunpack.c.h.b16 %v162
    %v243 = vunpack.c.l.b16 %v163
    %v244 = vunpack.c.h.b16 %v163
    %v245 = vunpack.c.l.b16 %v164
    %v246 = vunpack.c.h.b16 %v164
    %v247 = vunpack.c.l.b16 %v165
    %v248 = vunpack.c.h.b16 %v165
    %v249 = vunpack.c.l.b16 %v166
    %v250 = vunpack.c.h.b16 %v166
    %v251 = vunpack.c.l.b16 %v167
    %v252 = vunpack.c.h.b16 %v167
    %v253 = vunpack.c.l.b16 %v168
    %v254 = vunpack.c.h.b16 %v168
    %v255 = vunpack.c.l.b16 %v169
    %v256 = vunpack.c.h.b16 %v169
    %v257 = vunpack.c.l.b16 %v170
    %v258 = vunpack.c.h.b16 %v170
    %v259 = vunpack.c.l.b16 %v171
    %v260 = vunpack.c.h.b16 %v171
    %v261 = vunpack.c.l.b16 %v172
    %v262 = vunpack.c.h.b16 %v172
    %v263 = vunpack.c.l.b16 %v173
    %v264 = vunpack.c.h.b16 %v173
    %v265 = vunpack.c.l.b16 %v174
    %v266 = vunpack.c.h.b16 %v174
    %v267 = vunpack.c.l.b16 %v175
    %v268 = vunpack.c.h.b16 %v175
    %v269 = vunpack.c.l.b16 %v176
    %v270 = vunpack.c.h.b16 %v176
    %v271 = vunpack.c.l.b16 %v177
    %v272 = vunpack.c.h.b16 %v177
    %v273 = vunpack.c.l.b16 %v178
    %v274 = vunpack.c.h.b16 %v178
    %v275 = vunpack.c.l.b16 %v179
    %v276 = vunpack.c.h.b16 %v179
    %v277 = vunpack.c.l.b16 %v180
    %v278 = vunpack.c.h.b16 %v180
    %v279 = vunpack.c.l.b16 %v181
    %v280 = vunpack.c.h.b16 %v181
    %v281 = vunpack.c.l.b16 %v182
    %v282 = vunpack.c.h.b16 %v182
    %v283 = vunpack.c.l.b16 %v183
    %v284 = vunpack.c.h.b16 %v183
    %v285 = vunpack.c.l.b16 %v184
    %v286 = vunpack.c.h.b16 %v184
    %v287 = vunpack.c.l.b16 %v185
    %v288 = vunpack.c.h.b16 %v185
    %v289 = vunpack.c.l.b16 %v186
    %v290 = vunpack.c.h.b16 %v186
    %v291 = vunpack.c.l.b16 %v187
    %v292 = vunpack.c.h.b16 %v187
    %v293 = vunpack.c.l.b16 %v188
    %v294 = vunpack.c.h.b16 %v188
    %v295 = vunpack.c.l.b16 %v189
    %v296 = vunpack.c.h.b16 %v189
    %v297 = vunpack.c.l.b16 %v190
    %v298 = vunpack.c.h.b16 %v190
    %v299 = vpack.c.b16 %v237, %v235
    %v300 = vpack.c.b16 %v238, %v236
    %v301 = vpack.c.b16 %v241, %v239
    %v302 = vpack.c.b16 %v242, %v240
    %v303 = vpack.c.b16 %v245, %v243
    %v304 = vpack.c.b16 %v246, %v244
    %v305 = vpack.c.b16 %v249, %v247
    %v306 = vpack.c.b16 %v250, %v248
    %v307 = vpack.c.b16 %v253, %v251
    %v308 = vpack.c.b16 %v254, %v252
    %v309 = vpack.c.b16 %v257, %v255
    %v310 = vpack.c.b16 %v258, %v256
    %v311 = vpack.c.b16 %v261, %v259
    %v312 = vpack.c.b16 %v262, %v260
    %v313 = vpack.c.b16 %v265, %v263
    %v314 = vpack.c.b16 %v266, %v264
    %v315 = vpack.c.b16 %v269, %v267
    %v316 = vpack.c.b16 %v270, %v268
    %v317 = vpack.c.b16 %v273, %v271
    %v318 = vpack.c.b16 %v274, %v272
    %v319 = vpack.c.b16 %v277, %v275
    %v320 = vpack.c.b16 %v278, %v276
    %v321 = vpack.c.b16 %v281, %v279
    %v322 = vpack.c.b16 %v282, %v280
    %v323 = vpack.c.b16 %v285, %v283
    %v324 = vpack.c.b16 %v286, %v284
    %v325 = vpack.c.b16 %v289, %v287
    %v326 = vpack.c.b16 %v290, %v288
    %v327 = vpack.c.b16 %v293, %v291
    %v328 = vpack.c.b16 %v294, %v292
    %v329 = vpack.c.b16 %v297, %v295
    %v330 = vpack.c.b16 %v298, %v296
    %363 = vmatprep.subr.bf16.mxu0 %v300
    %364 = vmatpush1.bf16.msra.mxu0 %v299
    %365 = vmatprep.subr.bf16.mxu0 %v302
    %366 = vmatpush1.bf16.msra.mxu0 %v301
    %367 = vmatprep.subr.bf16.mxu0 %v304
    %368 = vmatpush1.bf16.msra.mxu0 %v303
    %369 = vmatprep.subr.bf16.mxu0 %v306
    %370 = vmatpush1.bf16.msra.mxu0 %v305
    %371 = vmatprep.subr.bf16.mxu0 %v308
    %372 = vmatpush1.bf16.msra.mxu0 %v307
    %373 = vmatprep.subr.bf16.mxu0 %v310
    %374 = vmatpush1.bf16.msra.mxu0 %v309
    %375 = vmatprep.subr.bf16.mxu0 %v312
    %376 = vmatpush1.bf16.msra.mxu0 %v311
    %377 = vmatprep.subr.bf16.mxu0 %v314
    %378 = vmatpush1.bf16.msra.mxu0 %v313
    %379 = vmatprep.subr.bf16.mxu0 %v316
    %380 = vmatpush1.bf16.msra.mxu0 %v315
    %381 = vmatprep.subr.bf16.mxu0 %v318
    %382 = vmatpush1.bf16.msra.mxu0 %v317
    %383 = vmatprep.subr.bf16.mxu0 %v320
    %384 = vmatpush1.bf16.msra.mxu0 %v319
    %385 = vmatprep.subr.bf16.mxu0 %v322
    %386 = vmatpush1.bf16.msra.mxu0 %v321
    %387 = vmatprep.subr.bf16.mxu0 %v324
    %388 = vmatpush1.bf16.msra.mxu0 %v323
    %389 = vmatprep.subr.bf16.mxu0 %v326
    %390 = vmatpush1.bf16.msra.mxu0 %v325
    %391 = vmatprep.subr.bf16.mxu0 %v328
    %392 = vmatpush1.bf16.msra.mxu0 %v327
    %393 = vmatprep.subr.bf16.mxu0 %v330
    %394 = vmatpush1.bf16.msra.mxu0 %v329
    %395 = vmatprep.mubr.bf16.mxu0 %v158
    %396 = vmatmul.mubr.bf16.gmra.mrb[0].mxu0 %v157
    %v397 = vpop.f32.mrb[0].mxu0
    %v398 = vadd.f32 %v196, %v397
    %v399 = vpop.f32.mrb[0].mxu0
    %v400 = vadd.f32 %v200, %v399
    %v401 = vpop.f32.mrb[0].mxu0
    %v402 = vadd.f32 %v196, %v401
    %v403 = vpop.f32.mrb[0].mxu0
    %v404 = vadd.f32 %v200, %v403
    %405 = vdwg.mxu0
    %v406 = vmax.f32 %v398, 0.0
    %v407 = vmax.f32 %v400, 0.0
    %v408 = vmax.f32 %v402, 0.0
    %v409 = vmax.f32 %v404, 0.0
    %410 = vst [vmem:[#allocation8] sm:$0xff] %v406
    %411 = vst [vmem:[#allocation8 + $0x8] sm:$0xff] %v407
    %412 = vst [vmem:[#allocation8 + $0x10] sm:$0xff] %v408
    %413 = vst [vmem:[#allocation8 + $0x18] sm:$0xff] %v409
    // Predicated region
    $region34: #{tpu_custom_call.1} parent=1 // pred_check
      _
    $region35: #{tpu_custom_call.1} parent=1 // pred_check_branch
      %415 = sbr.rel (0) target = $region37
    $region36: #{tpu_custom_call.1} parent=1 // pred_region
      %s417 = ssub.s32 512, 512
      %418 = vsyncadd [#allocation4], %s417
      %s419 = sshll.u32 [#allocation8], 4
      %s420 = int_to_ptr.vmem [resolvable:$true] %s419
      %425 = dma.vmem_to_hbm [thread:$0]  %s420, 512, %s5, [#allocation4], 256, 256, 16
    $region37: #{tpu_custom_call.1} parent=1 // pred_fallthru
      _
    // Predicated region
    $region38: #{tpu_custom_call.1} parent=1 // pred_check
      _
    $region39: #{tpu_custom_call.1} parent=1 // pred_check_branch
      %427 = sbr.rel (0) target = $region41
    $region40: #{tpu_custom_call.1} parent=1 // pred_region
      %428 = dma.done [#allocation4], 512
    $region41: #{tpu_custom_call.1} parent=1 // pred_fallthru
      _
    %429 = vsyncpa [#allocation3], 1
    %430 = vsyncpa [#allocation6], 1
    %431 = vsyncpa [#allocation4], 1

// kernel: tpu_custom_call.1
$region0: #{tpu_custom_call.1}
  #allocation0 [shape = 'u32[]', space=smem, size = 0x4, offset = 0x4, fixed_abs, tag = 'smem constant byte address 0x4 - core index']
  #allocation1 [shape = 'u32[144,128]{1,0:T(1,128)}', space=vmem, size = 0x12000, scoped, tag = 'internal scratch']
  %s0 = inlined_call_operand.hbm [shape: bf16[16,32], index: 0, kind: input, shape index: {}]
  %s1 = inlined_call_operand.hbm [shape: bf16[32,256], index: 1, kind: input, shape index: {}]
  %s2 = inlined_call_operand.vmem [shape: f32[1,256], index: 2, kind: input, shape index: {}]
  %s3 = inlined_call_operand.hbm [shape: bf16[256,256], index: 3, kind: input, shape index: {}]
  %s4 = inlined_call_operand.vmem [shape: f32[1,256], index: 4, kind: input, shape index: {}]
  %s5 = inlined_call_operand.hbm [shape: f32[16,256], index: 5, kind: output, shape index: {}]
  %s6 = sld [smem:[#allocation0]]
  $region42: #{tpu_custom_call.1} parent=0
    _
  %s8 = ssub.s32 1, %s6
  %s9 = scalar_select 0, %s8, %s6
  $region1: #{tpu_custom_call.1} parent=0
    #allocation2 [shape = 'u8[4096]{0}', space=vmem, size = 0x1000, scoped, tag = 'input window, operand 0, single buffered']
    #allocation3 [shape = 's32[1]{0}', space=sflag, size = 0x4, scoped, tag = 'scoped memory for tpu_custom_call.1']
    #allocation4 [shape = 's32[1]{0}', space=sflag, size = 0x4, scoped, tag = 'scoped memory for tpu_custom_call.1']
    #allocation5 [shape = 'u8[16384]{0}', space=vmem, size = 0x4000, scoped, tag = 'input window, operand 1, single buffered']
    #allocation6 [shape = 's32[1]{0}', space=sflag, size = 0x4, scoped, tag = 'scoped memory for tpu_custom_call.1']
    #allocation7 [shape = 'u8[131072]{0}', space=vmem, size = 0x20000, scoped, tag = 'input window, operand 3, single buffered']
    #allocation8 [shape = 'u8[16384]{0}', space=vmem, size = 0x4000, scoped, tag = 'output window, operand 0, single buffered']
    %10 = vsyncpa [#allocation3], 0
    %11 = vsyncpa [#allocation6], 0
    %12 = vsyncpa [#allocation4], 0
    // Predicated region
    $region2: #{tpu_custom_call.1} parent=1 // pred_check
      _
    $region3: #{tpu_custom_call.1} parent=1 // pred_check_branch
      %14 = sbr.rel (0) target = $region5
    $region4: #{tpu_custom_call.1} parent=1 // pred_region
      %s16 = ssub.s32 128, 128
      %17 = vsyncadd [#allocation3], %s16
      %s18 = sshll.u32 [#allocation2], 4
      %s19 = int_to_ptr.vmem [resolvable:$true] %s18
      %24 = dma.hbm_to_vmem [thread:$0]  %s0, 128, %s19, [#allocation3], 64, 64, 4
    $region5: #{tpu_custom_call.1} parent=1 // pred_fallthru
      _
    // Predicated region
    $region6: #{tpu_custom_call.1} parent=1 // pred_check
      _
    $region7: #{tpu_custom_call.1} parent=1 // pred_check_branch
      %26 = sbr.rel (0) target = $region9
    $region8: #{tpu_custom_call.1} parent=1 // pred_region
      %s28 = ssub.s32 512, 512
      %29 = vsyncadd [#allocation6], %s28
      %s30 = sshll.u32 [#allocation5], 4
      %s31 = int_to_ptr.vmem [resolvable:$true] %s30
      %36 = dma.hbm_to_vmem [thread:$0]  %s1, 512, %s31, [#allocation6], 128, 128, 8
    $region9: #{tpu_custom_call.1} parent=1 // pred_fallthru
      _
    // Predicated region
    $region10: #{tpu_custom_call.1} parent=1 // pred_check
      _
    $region11: #{tpu_custom_call.1} parent=1 // pred_check_branch
      %38 = sbr.rel (0) target = $region13
    $region12: #{tpu_custom_call.1} parent=1 // pred_region
      _
    $region13: #{tpu_custom_call.1} parent=1 // pred_fallthru
      _
    // Predicated region
    $region14: #{tpu_custom_call.1} parent=1 // pred_check
      _
    $region15: #{tpu_custom_call.1} parent=1 // pred_check_branch
      %40 = sbr.rel (0) target = $region17
    $region16: #{tpu_custom_call.1} parent=1 // pred_region
      %s42 = ssub.s32 4096, 4096
      %43 = vsyncadd [#allocation6], %s42
      %s44 = sshll.u32 [#allocation7], 4
      %s45 = int_to_ptr.vmem [resolvable:$true] %s44
      %50 = dma.hbm_to_vmem [thread:$0]  %s3, 4096, %s45, [#allocation6], 128, 128, 8
    $region17: #{tpu_custom_call.1} parent=1 // pred_fallthru
      _
    // Predicated region
    $region18: #{tpu_custom_call.1} parent=1 // pred_check
      _
    $region19: #{tpu_custom_call.1} parent=1 // pred_check_branch
      %52 = sbr.rel (0) target = $region21
    $region20: #{tpu_custom_call.1} parent=1 // pred_region
      _
    $region21: #{tpu_custom_call.1} parent=1 // pred_fallthru
      _
    // Predicated region
    $region22: #{tpu_custom_call.1} parent=1 // pred_check
      _
    $region23: #{tpu_custom_call.1} parent=1 // pred_check_branch
      %54 = sbr.rel (0) target = $region25
    $region24: #{tpu_custom_call.1} parent=1 // pred_region
      %55 = dma.done [#allocation3], 128
    $region25: #{tpu_custom_call.1} parent=1 // pred_fallthru
      _
    // Predicated region
    $region26: #{tpu_custom_call.1} parent=1 // pred_check
      _
    $region27: #{tpu_custom_call.1} parent=1 // pred_check_branch
      %57 = sbr.rel (0) target = $region29
    $region28: #{tpu_custom_call.1} parent=1 // pred_region
      %58 = dma.done [#allocation6], 512
    $region29: #{tpu_custom_call.1} parent=1 // pred_fallthru
      _
    // Predicated region
    $region30: #{tpu_custom_call.1} parent=1 // pred_check
      _
    $region31: #{tpu_custom_call.1} parent=1 // pred_check_branch
      %60 = sbr.rel (0) target = $region33
    $region32: #{tpu_custom_call.1} parent=1 // pred_region
      %61 = dma.done [#allocation6], 4096
    $region33: #{tpu_custom_call.1} parent=1 // pred_fallthru
      _
    %v63 = vld [vmem:[#allocation2] sm:$0xf]
    %v64 = vld [vmem:[#allocation2 + $0x4] sm:$0xf]
    %v65 = vld [vmem:[#allocation5] sm:$0xff]
    %v66 = vld [vmem:[#allocation5 + $0x8] sm:$0xff]
    %v67 = vld [vmem:[#allocation5 + $0x10] sm:$0xff]
    %v68 = vld [vmem:[#allocation5 + $0x18] sm:$0xff]
    %v69 = vld [vmem:[%s2] sm:$0x3]
    %v71 = vlaneseq
    %v72 = vshrl.u32 %v71, 7
    %v73 = vsub.s32 0, %v72
    %v74 = vrot.slane %v69, %v73
    %v75 = vlaneseq
    %v76 = vshrl.u32 %v75, 7
    %v77 = vsub.s32 1, %v76
    %v78 = vrot.slane %v69, %v77
    %v83 = vunpack.c.l.b16 %v63
    %v84 = vunpack.c.l.b16 %v64
    %v85 = vpack.c.b16 %v84, %v83
    %v90 = vunpack.c.l.b16 %v65
    %v91 = vunpack.c.h.b16 %v65
    %v92 = vunpack.c.l.b16 %v66
    %v93 = vunpack.c.h.b16 %v66
    %v94 = vunpack.c.l.b16 %v67
    %v95 = vunpack.c.h.b16 %v67
    %v96 = vunpack.c.l.b16 %v68
    %v97 = vunpack.c.h.b16 %v68
    %v98 = vpack.c.b16 %v92, %v90
    %v99 = vpack.c.b16 %v93, %v91
    %v100 = vpack.c.b16 %v96, %v94
    %v101 = vpack.c.b16 %v97, %v95
    %vm106 = vcmask 261120
    %v108 = vsel %vm106, %v85, 0
    %110 = vmatprep.subr.bf16.mxu0 %v99
    %111 = vmatpush1.bf16.msra.mxu0 %v98
    %112 = vmatprep.subr.bf16.mxu0 %v101
    %113 = vmatpush1.bf16.msra.mxu0 %v100
    %114 = vmatprep.subr.bf16.mxu0 0
    %115 = vmatpush1.bf16.msra.mxu0 0
    %116 = vmatprep.subr.bf16.mxu0 0
    %117 = vmatpush1.bf16.msra.mxu0 0
    %118 = vmatprep.subr.bf16.mxu0 0
    %119 = vmatpush1.bf16.msra.mxu0 0
    %120 = vmatprep.subr.bf16.mxu0 0
    %121 = vmatpush1.bf16.msra.mxu0 0
    %122 = vmatprep.subr.bf16.mxu0 0
    %123 = vmatpush1.bf16.msra.mxu0 0
    %124 = vmatprep.subr.bf16.mxu0 0
    %125 = vmatpush1.bf16.msra.mxu0 0
    %126 = vmatprep.subr.bf16.mxu0 0
    %127 = vmatpush1.bf16.msra.mxu0 0
    %128 = vmatprep.subr.bf16.mxu0 0
    %129 = vmatpush1.bf16.msra.mxu0 0
    %130 = vmatprep.subr.bf16.mxu0 0
    %131 = vmatpush1.bf16.msra.mxu0 0
    %132 = vmatprep.subr.bf16.mxu0 0
    %133 = vmatpush1.bf16.msra.mxu0 0
    %134 = vmatprep.subr.bf16.mxu0 0
    %135 = vmatpush1.bf16.msra.mxu0 0
    %136 = vmatprep.subr.bf16.mxu0 0
    %137 = vmatpush1.bf16.msra.mxu0 0
    %138 = vmatprep.subr.bf16.mxu0 0
    %139 = vmatpush1.bf16.msra.mxu0 0
    %140 = vmatprep.subr.bf16.mxu0 0
    %141 = vmatpush1.bf16.msra.mxu0 0
    %142 = vmatprep.mubr.bf16.mxu0 0
    %143 = vmatmul.mubr.bf16.gmra.mrb[0].mxu0 %v108
    %v144 = vpop.f32.mrb[0].mxu0
    %v145 = vadd.f32 %v74, %v144
    %v146 = vpop.f32.mrb[0].mxu0
    %v147 = vadd.f32 %v78, %v146
    %v148 = vpop.f32.mrb[0].mxu0
    %v149 = vadd.f32 %v74, %v148
    %v150 = vpop.f32.mrb[0].mxu0
    %v151 = vadd.f32 %v78, %v150
    %152 = vdwg.mxu0
    %v153 = vmax.f32 %v145, 0.0
    %v154 = vmax.f32 %v147, 0.0
    %v155 = vmax.f32 %v149, 0.0
    %v156 = vmax.f32 %v151, 0.0
    %v157 = vpack.c.bf16 %v155, %v153
    %v158 = vpack.c.bf16 %v156, %v154
    %v159 = vld [vmem:[#allocation7] sm:$0xff]
    %v160 = vld [vmem:[#allocation7 + $0x8] sm:$0xff]
    %v161 = vld [vmem:[#allocation7 + $0x10] sm:$0xff]
    %v162 = vld [vmem:[#allocation7 + $0x18] sm:$0xff]
    %v163 = vld [vmem:[#allocation7 + $0x20] sm:$0xff]
    %v164 = vld [vmem:[#allocation7 + $0x28] sm:$0xff]
    %v165 = vld [vmem:[#allocation7 + $0x30] sm:$0xff]
    %v166 = vld [vmem:[#allocation7 + $0x38] sm:$0xff]
    %v167 = vld [vmem:[#allocation7 + $0x40] sm:$0xff]
    %v168 = vld [vmem:[#allocation7 + $0x48] sm:$0xff]
    %v169 = vld [vmem:[#allocation7 + $0x50] sm:$0xff]
    %v170 = vld [vmem:[#allocation7 + $0x58] sm:$0xff]
    %v171 = vld [vmem:[#allocation7 + $0x60] sm:$0xff]
    %v172 = vld [vmem:[#allocation7 + $0x68] sm:$0xff]
    %v173 = vld [vmem:[#allocation7 + $0x70] sm:$0xff]
    %v174 = vld [vmem:[#allocation7 + $0x78] sm:$0xff]
    %v175 = vld [vmem:[#allocation7 + $0x80] sm:$0xff]
    %v176 = vld [vmem:[#allocation7 + $0x88] sm:$0xff]
    %v177 = vld [vmem:[#allocation7 + $0x90] sm:$0xff]
    %v178 = vld [vmem:[#allocation7 + $0x98] sm:$0xff]
    %v179 = vld [vmem:[#allocation7 + $0xa0] sm:$0xff]
    %v180 = vld [vmem:[#allocation7 + $0xa8] sm:$0xff]
    %v181 = vld [vmem:[#allocation7 + $0xb0] sm:$0xff]
    %v182 = vld [vmem:[#allocation7 + $0xb8] sm:$0xff]
    %v183 = vld [vmem:[#allocation7 + $0xc0] sm:$0xff]
    %v184 = vld [vmem:[#allocation7 + $0xc8] sm:$0xff]
    %v185 = vld [vmem:[#allocation7 + $0xd0] sm:$0xff]
    %v186 = vld [vmem:[#allocation7 + $0xd8] sm:$0xff]
    %v187 = vld [vmem:[#allocation7 + $0xe0] sm:$0xff]
    %v188 = vld [vmem:[#allocation7 + $0xe8] sm:$0xff]
    %v189 = vld [vmem:[#allocation7 + $0xf0] sm:$0xff]
    %v190 = vld [vmem:[#allocation7 + $0xf8] sm:$0xff]
    %v191 = vld [vmem:[%s4] sm:$0x3]
    %v193 = vlaneseq
    %v194 = vshrl.u32 %v193, 7
    %v195 = vsub.s32 0, %v194
    %v196 = vrot.slane %v191, %v195
    %v197 = vlaneseq
    %v198 = vshrl.u32 %v197, 7
    %v199 = vsub.s32 1, %v198
    %v200 = vrot.slane %v191, %v199
    %v235 = vunpack.c.l.b16 %v159
    %v236 = vunpack.c.h.b16 %v159
    %v237 = vunpack.c.l.b16 %v160
    %v238 = vunpack.c.h.b16 %v160
    %v239 = vunpack.c.l.b16 %v161
    %v240 = vunpack.c.h.b16 %v161
    %v241 = vunpack.c.l.b16 %v162
    %v242 = vunpack.c.h.b16 %v162
    %v243 = vunpack.c.l.b16 %v163
    %v244 = vunpack.c.h.b16 %v163
    %v245 = vunpack.c.l.b16 %v164
    %v246 = vunpack.c.h.b16 %v164
    %v247 = vunpack.c.l.b16 %v165
    %v248 = vunpack.c.h.b16 %v165
    %v249 = vunpack.c.l.b16 %v166
    %v250 = vunpack.c.h.b16 %v166
    %v251 = vunpack.c.l.b16 %v167
    %v252 = vunpack.c.h.b16 %v167
    %v253 = vunpack.c.l.b16 %v168
    %v254 = vunpack.c.h.b16 %v168
    %v255 = vunpack.c.l.b16 %v169
    %v256 = vunpack.c.h.b16 %v169
    %v257 = vunpack.c.l.b16 %v170
    %v258 = vunpack.c.h.b16 %v170
    %v259 = vunpack.c.l.b16 %v171
    %v260 = vunpack.c.h.b16 %v171
    %v261 = vunpack.c.l.b16 %v172
    %v262 = vunpack.c.h.b16 %v172
    %v263 = vunpack.c.l.b16 %v173
    %v264 = vunpack.c.h.b16 %v173
    %v265 = vunpack.c.l.b16 %v174
    %v266 = vunpack.c.h.b16 %v174
    %v267 = vunpack.c.l.b16 %v175
    %v268 = vunpack.c.h.b16 %v175
    %v269 = vunpack.c.l.b16 %v176
    %v270 = vunpack.c.h.b16 %v176
    %v271 = vunpack.c.l.b16 %v177
    %v272 = vunpack.c.h.b16 %v177
    %v273 = vunpack.c.l.b16 %v178
    %v274 = vunpack.c.h.b16 %v178
    %v275 = vunpack.c.l.b16 %v179
    %v276 = vunpack.c.h.b16 %v179
    %v277 = vunpack.c.l.b16 %v180
    %v278 = vunpack.c.h.b16 %v180
    %v279 = vunpack.c.l.b16 %v181
    %v280 = vunpack.c.h.b16 %v181
    %v281 = vunpack.c.l.b16 %v182
    %v282 = vunpack.c.h.b16 %v182
    %v283 = vunpack.c.l.b16 %v183
    %v284 = vunpack.c.h.b16 %v183
    %v285 = vunpack.c.l.b16 %v184
    %v286 = vunpack.c.h.b16 %v184
    %v287 = vunpack.c.l.b16 %v185
    %v288 = vunpack.c.h.b16 %v185
    %v289 = vunpack.c.l.b16 %v186
    %v290 = vunpack.c.h.b16 %v186
    %v291 = vunpack.c.l.b16 %v187
    %v292 = vunpack.c.h.b16 %v187
    %v293 = vunpack.c.l.b16 %v188
    %v294 = vunpack.c.h.b16 %v188
    %v295 = vunpack.c.l.b16 %v189
    %v296 = vunpack.c.h.b16 %v189
    %v297 = vunpack.c.l.b16 %v190
    %v298 = vunpack.c.h.b16 %v190
    %v299 = vpack.c.b16 %v237, %v235
    %v300 = vpack.c.b16 %v238, %v236
    %v301 = vpack.c.b16 %v241, %v239
    %v302 = vpack.c.b16 %v242, %v240
    %v303 = vpack.c.b16 %v245, %v243
    %v304 = vpack.c.b16 %v246, %v244
    %v305 = vpack.c.b16 %v249, %v247
    %v306 = vpack.c.b16 %v250, %v248
    %v307 = vpack.c.b16 %v253, %v251
    %v308 = vpack.c.b16 %v254, %v252
    %v309 = vpack.c.b16 %v257, %v255
    %v310 = vpack.c.b16 %v258, %v256
    %v311 = vpack.c.b16 %v261, %v259
    %v312 = vpack.c.b16 %v262, %v260
    %v313 = vpack.c.b16 %v265, %v263
    %v314 = vpack.c.b16 %v266, %v264
    %v315 = vpack.c.b16 %v269, %v267
    %v316 = vpack.c.b16 %v270, %v268
    %v317 = vpack.c.b16 %v273, %v271
    %v318 = vpack.c.b16 %v274, %v272
    %v319 = vpack.c.b16 %v277, %v275
    %v320 = vpack.c.b16 %v278, %v276
    %v321 = vpack.c.b16 %v281, %v279
    %v322 = vpack.c.b16 %v282, %v280
    %v323 = vpack.c.b16 %v285, %v283
    %v324 = vpack.c.b16 %v286, %v284
    %v325 = vpack.c.b16 %v289, %v287
    %v326 = vpack.c.b16 %v290, %v288
    %v327 = vpack.c.b16 %v293, %v291
    %v328 = vpack.c.b16 %v294, %v292
    %v329 = vpack.c.b16 %v297, %v295
    %v330 = vpack.c.b16 %v298, %v296
    %363 = vmatprep.subr.bf16.mxu0 %v300
    %364 = vmatpush1.bf16.msra.mxu0 %v299
    %365 = vmatprep.subr.bf16.mxu0 %v302
    %366 = vmatpush1.bf16.msra.mxu0 %v301
    %367 = vmatprep.subr.bf16.mxu0 %v304
    %368 = vmatpush1.bf16.msra.mxu0 %v303
    %369 = vmatprep.subr.bf16.mxu0 %v306
    %370 = vmatpush1.bf16.msra.mxu0 %v305
    %371 = vmatprep.subr.bf16.mxu0 %v308
    %372 = vmatpush1.bf16.msra.mxu0 %v307
    %373 = vmatprep.subr.bf16.mxu0 %v310
    %374 = vmatpush1.bf16.msra.mxu0 %v309
    %375 = vmatprep.subr.bf16.mxu0 %v312
    %376 = vmatpush1.bf16.msra.mxu0 %v311
    %377 = vmatprep.subr.bf16.mxu0 %v314
    %378 = vmatpush1.bf16.msra.mxu0 %v313
    %379 = vmatprep.subr.bf16.mxu0 %v316
    %380 = vmatpush1.bf16.msra.mxu0 %v315
    %381 = vmatprep.subr.bf16.mxu0 %v318
    %382 = vmatpush1.bf16.msra.mxu0 %v317
    %383 = vmatprep.subr.bf16.mxu0 %v320
    %384 = vmatpush1.bf16.msra.mxu0 %v319
    %385 = vmatprep.subr.bf16.mxu0 %v322
    %386 = vmatpush1.bf16.msra.mxu0 %v321
    %387 = vmatprep.subr.bf16.mxu0 %v324
    %388 = vmatpush1.bf16.msra.mxu0 %v323
    %389 = vmatprep.subr.bf16.mxu0 %v326
    %390 = vmatpush1.bf16.msra.mxu0 %v325
    %391 = vmatprep.subr.bf16.mxu0 %v328
    %392 = vmatpush1.bf16.msra.mxu0 %v327
    %393 = vmatprep.subr.bf16.mxu0 %v330
    %394 = vmatpush1.bf16.msra.mxu0 %v329
    %395 = vmatprep.mubr.bf16.mxu0 %v158
    %396 = vmatmul.mubr.bf16.gmra.mrb[0].mxu0 %v157
    %v397 = vpop.f32.mrb[0].mxu0
    %v398 = vadd.f32 %v196, %v397
    %v399 = vpop.f32.mrb[0].mxu0
    %v400 = vadd.f32 %v200, %v399
    %v401 = vpop.f32.mrb[0].mxu0
    %v402 = vadd.f32 %v196, %v401
    %v403 = vpop.f32.mrb[0].mxu0
    %v404 = vadd.f32 %v200, %v403
    %405 = vdwg.mxu0
    %v406 = vmax.f32 %v398, 0.0
    %v407 = vmax.f32 %v400, 0.0
    %v408 = vmax.f32 %v402, 0.0
    %v409 = vmax.f32 %v404, 0.0
    %410 = vst [vmem:[#allocation8] sm:$0xff] %v406
    %411 = vst [vmem:[#allocation8 + $0x8] sm:$0xff] %v407
    %412 = vst [vmem:[#allocation8 + $0x10] sm:$0xff] %v408
    %413 = vst [vmem:[#allocation8 + $0x18] sm:$0xff] %v409
    // Predicated region
    $region34: #{tpu_custom_call.1} parent=1 // pred_check
      _
    $region35: #{tpu_custom_call.1} parent=1 // pred_check_branch
      %415 = sbr.rel (0) target = $region37
    $region36: #{tpu_custom_call.1} parent=1 // pred_region
      %s417 = ssub.s32 512, 512
      %418 = vsyncadd [#allocation4], %s417
      %s419 = sshll.u32 [#allocation8], 4
      %s420 = int_to_ptr.vmem [resolvable:$true] %s419
      %425 = dma.vmem_to_hbm [thread:$0]  %s420, 512, %s5, [#allocation4], 256, 256, 16
    $region37: #{tpu_custom_call.1} parent=1 // pred_fallthru
      _
    // Predicated region
    $region38: #{tpu_custom_call.1} parent=1 // pred_check
      _
    $region39: #{tpu_custom_call.1} parent=1 // pred_check_branch
      %427 = sbr.rel (0) target = $region41
    $region40: #{tpu_custom_call.1} parent=1 // pred_region
      %428 = dma.done [#allocation4], 512
    $region41: #{tpu_custom_call.1} parent=1 // pred_fallthru
      _
    %429 = vsyncpa [#allocation3], 1
    %430 = vsyncpa [#allocation6], 1
    %431 = vsyncpa [#allocation4], 1

</llo_original>
